<compile_context>
chip_gen: v7x
topology: tpu7x:2x2x1
jax: 0.10.0
libtpu: 0.0.40
codegen_flags: <defaults>
</compile_context>

<pallas_src>
import functools

import jax
import jax.numpy as jnp
from jax import lax
from jax.experimental import pallas as pl
from jax.experimental.pallas import tpu as pltpu


def _round_up(v, m):
    return (v + m - 1) // m * m


def _pick_tile(n, candidates=(2048, 1024, 512, 256, 128)):
    for c in candidates:
        if c <= n and n % c == 0:
            return c
    return n


# 3x3 conv taps in (dh, dw) order (used by the general temp_attn kernel).
_TAPS = tuple((dh, dw) for dh in (-1, 0, 1) for dw in (-1, 0, 1))


# ---------------------------------------------------------------------------
# channel_attn pieces: feature pooling + tiled Linear
# ---------------------------------------------------------------------------
def _channel_pool_kernel(x_ref, o_ref):
    xv = x_ref[...].astype(jnp.float32)          # (B, F, tS)
    o_ref[0] = jnp.mean(xv, axis=1)              # AvgPool2d([1, F]) + squeeze
    o_ref[1] = jnp.max(xv, axis=1)               # MaxPool2d([1, F]) + squeeze


def channel_pool(xt):
    """xt: (B, F, S) lane-dense -> (2, B, S) with [0] = avg, [1] = max."""
    B, F, S = xt.shape
    s_tile = _pick_tile(S)
    return pl.pallas_call(
        _channel_pool_kernel,
        out_shape=jax.ShapeDtypeStruct((2, B, S), jnp.float32),
        grid=(S // s_tile,),
        in_specs=[pl.BlockSpec((B, F, s_tile), lambda s: (0, 0, s))],
        out_specs=pl.BlockSpec((2, B, s_tile), lambda s: (0, 0, s)),
        compiler_params=pltpu.CompilerParams(dimension_semantics=("parallel",)),
    )(xt)


def _linear_kernel(x_ref, wt_ref, b_ref, o_ref):
    k = pl.program_id(1)

    @pl.when(k == 0)
    def _init():
        o_ref[...] = jnp.broadcast_to(b_ref[...], o_ref.shape).astype(o_ref.dtype)

    o_ref[...] += jnp.dot(x_ref[...], wt_ref[...],
                          preferred_element_type=jnp.float32)


def linear(x, w_t, b):
    """y = x @ w_t + b  (torch Linear with w_t = W.T).  x: (M, K), w_t: (K, N)."""
    M, K = x.shape
    _, N = w_t.shape
    n_tile = _pick_tile(N, (512, 256, 128))
    k_tile = _pick_tile(K, (512, 256, 128))
    return pl.pallas_call(
        _linear_kernel,
        out_shape=jax.ShapeDtypeStruct((M, N), jnp.float32),
        grid=(N // n_tile, K // k_tile),
        in_specs=[
            pl.BlockSpec((M, k_tile), lambda n, k: (0, k)),
            pl.BlockSpec((k_tile, n_tile), lambda n, k: (k, n)),
            pl.BlockSpec((1, n_tile), lambda n, k: (0, n)),
        ],
        out_specs=pl.BlockSpec((M, n_tile), lambda n, k: (0, n)),
        compiler_params=pltpu.CompilerParams(
            dimension_semantics=("parallel", "arbitrary")),
    )(x, w_t, b.reshape(1, N))


# ---------------------------------------------------------------------------
# Fused: channel-attention apply + temporal mean/max over the window axis
#        + width-only 3x3 conv (H == 1) + sigmoid  -> temporal map t (B, F)
# ---------------------------------------------------------------------------
def _chan_apply_pool_conv_kernel(z_ref, x_ref, a_ref, m_ref, b_ref,
                                 t_ref, ch_ref, sum_ref, max_ref, *, n_chan):
    # z_ref : (2, bt, st)  rows 0 = fc2(fc1(avg)), 1 = fc2(fc1(max))
    # x_ref : (bt, F, st)  lane-dense input block (window axis on lanes)
    # a_ref : (F, F)       banded conv matrix for the avg channel
    # m_ref : (F, F)       banded conv matrix for the max channel
    # b_ref : (1,) SMEM    conv bias
    # t_ref : (bt, F)      temporal attention map (written at last window step)
    # ch_ref: (bt, st)     channel attention (sigmoid), reused by the apply kernel
    s = pl.program_id(1)

    @pl.when(s == 0)
    def _init():
        sum_ref[...] = jnp.zeros(sum_ref.shape, jnp.float32)
        max_ref[...] = jnp.full(max_ref.shape, -jnp.inf, jnp.float32)

    ch = jax.nn.sigmoid(z_ref[0] + z_ref[1])                    # (bt, st)
    ch_ref[...] = ch
    # x1 = channel-attended input for this window tile; never stored to HBM.
    x1 = x_ref[...].astype(jnp.float32) * ch[:, None, :]        # (bt, F, st)
    sum_ref[...] += jnp.sum(x1, axis=2)                          # lane reduce
    max_ref[...] = jnp.maximum(max_ref[...], jnp.max(x1, axis=2))

    @pl.when(s == pl.num_programs(1) - 1)
    def _finish():
        avg = sum_ref[...] * (1.0 / n_chan)                      # (bt, F)
        mx = max_ref[...]
        # Width-only 3x3 conv (H == 1 -> only the middle kernel row contributes)
        # expressed as tiny banded-matrix contractions, done on the VPU/XLU.
        pre = (jnp.sum(avg[:, :, None] * a_ref[...][None, :, :], axis=1)
               + jnp.sum(mx[:, :, None] * m_ref[...][None, :, :], axis=1)
               + b_ref[0])
        t_ref[...] = jax.nn.sigmoid(pre)


def chan_apply_pool_conv(z3, xt, a_mat, m_mat, conv_b, *,
                         batch_tile=None, s_tile=None):
    """Returns (t, ch): t (B, F) temporal map, ch (B, S) channel attention."""
    _, B, S = z3.shape
    _, F, _ = xt.shape
    if batch_tile is None:
        batch_tile = 8 if (B % 8 == 0) else B
    if s_tile is None:
        s_tile = _pick_tile(S)
    assert B % batch_tile == 0 and S % s_tile == 0
    grid = (B // batch_tile, S // s_tile)
    kern = functools.partial(_chan_apply_pool_conv_kernel, n_chan=S)
    return pl.pallas_call(
        kern,
        out_shape=(jax.ShapeDtypeStruct((B, F), jnp.float32),
                   jax.ShapeDtypeStruct((B, S), jnp.float32)),
        grid=grid,
        in_specs=[
            pl.BlockSpec((2, batch_tile, s_tile), lambda b, s: (0, b, s)),
            pl.BlockSpec((batch_tile, F, s_tile), lambda b, s: (b, 0, s)),
            pl.BlockSpec((F, F), lambda b, s: (0, 0)),
            pl.BlockSpec((F, F), lambda b, s: (0, 0)),
            pl.BlockSpec(memory_space=pltpu.MemorySpace.SMEM),
        ],
        out_specs=(
            pl.BlockSpec((batch_tile, F), lambda b, s: (b, 0)),
            pl.BlockSpec((batch_tile, s_tile), lambda b, s: (b, s)),
        ),
        scratch_shapes=[pltpu.VMEM((batch_tile, F), jnp.float32),   # running sum
                        pltpu.VMEM((batch_tile, F), jnp.float32)],  # running max
        compiler_params=pltpu.CompilerParams(
            dimension_semantics=("parallel", "arbitrary"),
            vmem_limit_bytes=32 * 1024 * 1024),
    )(z3, xt, a_mat, m_mat, conv_b)


# ---------------------------------------------------------------------------
# Final apply: y = t[b, f] * ch[b, s] * x[b, f, s]  (x1 recomputed, not stored)
# ---------------------------------------------------------------------------
def _final_apply_kernel(x_ref, ch_ref, t_ref, o_ref):
    x1 = x_ref[...].astype(jnp.float32) * ch_ref[...][:, None, :]
    o_ref[...] = (x1 * t_ref[...][:, :, None]).astype(o_ref.dtype)


def final_apply(xt, ch, t, *, batch_tile=None, s_tile=None):
    B, F, S = xt.shape
    if batch_tile is None:
        batch_tile = 8 if (B % 8 == 0) else B
    if s_tile is None:
        s_tile = _pick_tile(S)
    grid = (B // batch_tile, S // s_tile)
    return pl.pallas_call(
        _final_apply_kernel,
        out_shape=jax.ShapeDtypeStruct((B, F, S), xt.dtype),
        grid=grid,
        in_specs=[
            pl.BlockSpec((batch_tile, F, s_tile), lambda b, s: (b, 0, s)),
            pl.BlockSpec((batch_tile, s_tile), lambda b, s: (b, s)),
            pl.BlockSpec((batch_tile, F), lambda b, s: (b, 0)),
        ],
        out_specs=pl.BlockSpec((batch_tile, F, s_tile), lambda b, s: (b, 0, s)),
        compiler_params=pltpu.CompilerParams(
            dimension_semantics=("parallel", "parallel")),
    )(xt, ch, t)


# ---------------------------------------------------------------------------
# General temp_attn kernel (image-like H, W), kept as a standalone.
# ---------------------------------------------------------------------------
def _temp_attn_kernel(x_ref, wm_ref, b_ref, o_ref, sum_ref, max_ref, *,
                      n_chan, width, lpad):
    c = pl.program_id(1)

    @pl.when(c == 0)
    def _init():
        sum_ref[...] = jnp.zeros(sum_ref.shape, jnp.float32)
        max_ref[...] = jnp.full(max_ref.shape, -jnp.inf, jnp.float32)

    ct = x_ref.shape[1]
    sub = 8 if ct % 8 == 0 else ct
    s_acc = sum_ref[...]
    m_acc = max_ref[...]
    for i in range(0, ct, sub):
        xc = x_ref[:, i:i + sub, :].astype(jnp.float32)      # (Bb, sub, L)
        s_acc = s_acc + jnp.sum(xc, axis=1)
        m_acc = jnp.maximum(m_acc, jnp.max(xc, axis=1))
    sum_ref[...] = s_acc
    max_ref[...] = m_acc

    @pl.when(c == pl.num_programs(1) - 1)
    def _finish():
        avg = sum_ref[...] * (1.0 / n_chan)                  # (Bb, L)
        mx = max_ref[...]
        acc = jnp.full(avg.shape, b_ref[0], dtype=jnp.float32)
        rolled = {}
        for t, (dh, dw) in enumerate(_TAPS):
            shift = (-(dh * width + dw)) % lpad
            if shift not in rolled:
                if shift == 0:
                    rolled[shift] = (avg, mx)
                else:
                    rolled[shift] = (pltpu.roll(avg, shift=shift, axis=1),
                                     pltpu.roll(mx, shift=shift, axis=1))
            avg_s, max_s = rolled[shift]
            acc = acc + avg_s * wm_ref[t:t + 1, :] + max_s * wm_ref[9 + t:10 + t, :]
        o_ref[...] = jax.nn.sigmoid(acc).astype(o_ref.dtype)


def temp_attn_forward(x, conv_w, conv_b, *, batch_tile=None, chan_tile=None,
                      block_budget_bytes=256 * 1024):
    """temp_attn.forward: x (B, C, H, W) -> sigmoid(conv3x3([mean_C; max_C])) (B, 1, H, W)."""
    B, C, H, W = x.shape
    HW = H * W
    L = max(128, _round_up(HW, 128))             # lane-dense flattened spatial axis

    xr = x.reshape(B, C, HW)
    if L != HW:
        xr = jnp.pad(xr, ((0, 0), (0, 0), (0, L - HW)))

    pos = jnp.arange(L)
    hh = pos // W
    ww = pos % W
    w33 = conv_w.reshape(2, 3, 3).astype(jnp.float32)
    rows = []
    for cin in range(2):                         # 0 = avg, 1 = max (cat order)
        for dh, dw in _TAPS:
            valid = ((hh + dh >= 0) & (hh + dh < H) &
                     (ww + dw >= 0) & (ww + dw < W) & (pos < HW))
            rows.append(jnp.where(valid, w33[cin, dh + 1, dw + 1], 0.0))
    wmask = jnp.stack(rows, axis=0)              # (18, L)

    if batch_tile is None:
        batch_tile = 1
    if chan_tile is None:
        chan_tile = max(1, min(C, block_budget_bytes // max(1, batch_tile * L * 4)))
        while C % chan_tile:
            chan_tile -= 1
    assert B % batch_tile == 0 and C % chan_tile == 0

    grid = (B // batch_tile, C // chan_tile)
    kernel = functools.partial(_temp_attn_kernel, n_chan=C, width=W, lpad=L)

    out_flat = pl.pallas_call(
        kernel,
        out_shape=jax.ShapeDtypeStruct((B, L), x.dtype),
        grid=grid,
        in_specs=[
            pl.BlockSpec((batch_tile, chan_tile, L), lambda b, c: (b, c, 0)),
            pl.BlockSpec((18, L), lambda b, c: (0, 0)),
            pl.BlockSpec(memory_space=pltpu.MemorySpace.SMEM),
        ],
        out_specs=pl.BlockSpec((batch_tile, L), lambda b, c: (b, 0)),
        scratch_shapes=[
            pltpu.VMEM((batch_tile, L), jnp.float32),
            pltpu.VMEM((batch_tile, L), jnp.float32),
        ],
        compiler_params=pltpu.CompilerParams(
            dimension_semantics=("parallel", "arbitrary"),
            vmem_limit_bytes=32 * 1024 * 1024,
        ),
    )(xr, wmask, conv_b.astype(jnp.float32))

    return out_flat[:, :HW].reshape(B, 1, H, W)


def temp_attn_reference(x, conv_w, conv_b):
    avg_p = jnp.mean(x, axis=1, keepdims=True)
    max_p = jnp.max(x, axis=1, keepdims=True)
    pooled = jnp.concatenate([avg_p, max_p], axis=1)
    out = lax.conv_general_dilated(
        pooled, conv_w, (1, 1), ((1, 1), (1, 1)),
        dimension_numbers=("NCHW", "OIHW", "NCHW"))
    return jax.nn.sigmoid(out + conv_b.reshape(1, 1, 1, 1))


# ---------------------------------------------------------------------------
# CBAM forward (fused composition) + pure-JAX reference
# ---------------------------------------------------------------------------
def cbam_forward(x, params):
    """x: (B, window_size, 1, features) -> same shape, CBAM.forward semantics."""
    B, S, _, F = x.shape
    # Lane-dense layout: window_size (S) on lanes (wrapper-side layout plumbing).
    xt = jnp.transpose(x.reshape(B, S, F), (0, 2, 1)).astype(jnp.float32)  # (B, F, S)

    # ---- channel attention MLP ----
    pooled = channel_pool(xt)                        # (2, B, S): [avg; max]
    m = pooled.reshape(2 * B, S)
    m_pad = _round_up(2 * B, 8)
    if m_pad != 2 * B:                               # pad rows for MXU-friendly M
        m = jnp.pad(m, ((0, m_pad - 2 * B), (0, 0)))
    h = linear(m, params["w1_t"], params["b1"])      # fc1 (avg & max rows share W)
    z = linear(h, params["w2_t"], params["b2"])      # fc2
    z3 = z[:2 * B].reshape(2, B, S)                  # [0] avg path, [1] max path

    # ---- banded width-conv matrices (H == 1 -> only the middle 3x3 row acts) ----
    w33 = params["conv_w"].reshape(2, 3, 3).astype(jnp.float32)
    idx = jnp.arange(F)
    k = idx[:, None] - idx[None, :] + 1              # kw tap index per (i, j)
    valid = (k >= 0) & (k <= 2)
    kc = jnp.clip(k, 0, 2)
    a_mat = jnp.where(valid, w33[0, 1, :][kc], 0.0)  # avg channel (cat order: avg, max)
    m_mat = jnp.where(valid, w33[1, 1, :][kc], 0.0)  # max channel

    # ---- fused channel-apply + temporal pool + conv + sigmoid ----
    t, ch = chan_apply_pool_conv(z3, xt, a_mat, m_mat,
                                 params["conv_b"].astype(jnp.float32))

    # ---- y = temporal * channel * x (x1 recomputed in-kernel, never stored) ----
    y_t = final_apply(xt, ch, t)                     # (B, F, S)
    return jnp.transpose(y_t, (0, 2, 1)).reshape(B, S, 1, F).astype(x.dtype)


def cbam_reference(x, w1, b1, w2, b2, conv_w, conv_b):
    B, S, _, F = x.shape
    mp = jnp.max(x, axis=3).reshape(B, S)
    ap = jnp.mean(x, axis=3).reshape(B, S)

    def fc(v, w, b):
        return jnp.dot(v, w.T, precision=jax.lax.Precision.HIGHEST) + b

    mz = fc(fc(mp, w1, b1), w2, b2)
    az = fc(fc(ap, w1, b1), w2, b2)
    ch = jax.nn.sigmoid(mz + az).reshape(B, S, 1, 1)
    x1 = ch * x

    tmax = jnp.max(x1, axis=1, keepdims=True)
    tavg = jnp.mean(x1, axis=1, keepdims=True)
    cat = jnp.concatenate([tavg, tmax], axis=1)
    t = lax.conv_general_dilated(
        cat, conv_w, (1, 1), ((1, 1), (1, 1)),
        dimension_numbers=("NCHW", "OIHW", "NCHW"))
    t = jax.nn.sigmoid(t + conv_b.reshape(1, 1, 1, 1))
    return t * x1


if __name__ == "__main__":
    key = jax.random.PRNGKey(0)
    ks = jax.random.split(key, 8)

    # ---- full CBAM at small module-consistent shapes ----
    B, S, F = 2, 256, 2                 # batch, window_size, features
    x = jax.random.normal(ks[0], (B, S, 1, F), dtype=jnp.float32)

    bnd = 1.0 / (S ** 0.5)              # PyTorch Linear default init bounds
    w1 = jax.random.uniform(ks[1], (S, S), jnp.float32, -bnd, bnd)
    b1 = jax.random.uniform(ks[2], (S,), jnp.float32, -bnd, bnd)
    w2 = jax.random.uniform(ks[3], (S, S), jnp.float32, -bnd, bnd)
    b2 = jax.random.uniform(ks[4], (S,), jnp.float32, -bnd, bnd)
    cbnd = 1.0 / ((2 * 3 * 3) ** 0.5)   # Conv2d default init bounds
    conv_w = jax.random.uniform(ks[5], (1, 2, 3, 3), jnp.float32, -cbnd, cbnd)
    conv_b = jax.random.uniform(ks[6], (1,), jnp.float32, -cbnd, cbnd)

    params = dict(w1_t=w1.T, b1=b1, w2_t=w2.T, b2=b2, conv_w=conv_w, conv_b=conv_b)

    y = jax.block_until_ready(cbam_forward(x, params))
    y_ref = jax.block_until_ready(cbam_reference(x, w1, b1, w2, b2, conv_w, conv_b))
    assert y.shape == (B, S, 1, F)
    # Loose tolerance only covers MXU default-precision (bf16-pass) matmul
    # accumulation-order differences between the kernel and the XLA reference.
    assert jnp.allclose(y, y_ref, atol=1e-2, rtol=1e-2), \
        float(jnp.max(jnp.abs(y - y_ref)))

    # ---- standalone general temp_attn kernel at image-like shapes (tight check) ----
    Bi, Ci, Hi, Wi = 2, 4, 16, 16
    xi = jax.random.normal(ks[7], (Bi, Ci, Hi, Wi), dtype=jnp.float32)
    t = jax.block_until_ready(temp_attn_forward(xi, conv_w, conv_b))
    t_ref = jax.block_until_ready(temp_attn_reference(xi, conv_w, conv_b))
    assert t.shape == (Bi, 1, Hi, Wi)
    assert jnp.allclose(t, t_ref, atol=1e-5, rtol=1e-5), \
        float(jnp.max(jnp.abs(t - t_ref)))

    print("KERNEL_OK")
</pallas_src>

<mosaic_0001>
module attributes {stable_mosaic.version = 11 : i64} {
  func.func @_channel_pool_kernel(%arg0: i32, %arg1: memref<2x2x256xf32, #tpu.memory_space<vmem>>, %arg2: memref<2x2x256xf32, #tpu.memory_space<vmem>>) attributes {dimension_semantics = [#tpu.dimension_semantics<parallel>], iteration_bounds = array<i64: 1>, scalar_prefetch = 0 : i64, scratch_operands = 0 : i64, tpu.core_type = #tpu.core_type<tc>, window_params = [{transform_indices = @transform_0, window_bounds = array<i64: 2, 2, 256>}, {transform_indices = @transform_1, window_bounds = array<i64: 2, 2, 256>}]} {
    %c0 = arith.constant 0 : index
    %c0_0 = arith.constant 0 : index
    %c0_1 = arith.constant 0 : index
    %0 = vector.load %arg1[%c0, %c0_0, %c0_1] : memref<2x2x256xf32, #tpu.memory_space<vmem>>, vector<2x2x256xf32>
    %cst = arith.constant dense<0.000000e+00> : vector<2x256xf32>
    %1 = vector.multi_reduction <add>, %0, %cst [1] : vector<2x2x256xf32> to vector<2x256xf32>
    %cst_2 = arith.constant 2.000000e+00 : f32
    %2 = vector.broadcast %cst_2 : f32 to vector<2x256xf32>
    %3 = arith.divf %1, %2 : vector<2x256xf32>
    %c0_3 = arith.constant 0 : index
    %c0_4 = arith.constant 0 : index
    %c0_5 = arith.constant 0 : index
    %4 = vector.load %arg2[%c0_3, %c0_4, %c0_5] : memref<2x2x256xf32, #tpu.memory_space<vmem>>, vector<1x2x256xf32>
    %5 = vector.shape_cast %4 : vector<1x2x256xf32> to vector<2x256xf32>
    %6 = vector.shape_cast %3 : vector<2x256xf32> to vector<1x2x256xf32>
    tpu.vector_store %arg2[%c0_3, %c0_4, %c0_5], %6 {strides = array<i32>} : memref<2x2x256xf32, #tpu.memory_space<vmem>>, vector<1x2x256xf32>,
    %cst_6 = arith.constant dense<0xFF800000> : vector<2x256xf32>
    %7 = vector.multi_reduction <maximumf>, %0, %cst_6 [1] : vector<2x2x256xf32> to vector<2x256xf32>
    %c1 = arith.constant 1 : index
    %c0_7 = arith.constant 0 : index
    %c0_8 = arith.constant 0 : index
    %8 = vector.load %arg2[%c1, %c0_7, %c0_8] : memref<2x2x256xf32, #tpu.memory_space<vmem>>, vector<1x2x256xf32>
    %9 = vector.shape_cast %8 : vector<1x2x256xf32> to vector<2x256xf32>
    %10 = vector.shape_cast %7 : vector<2x256xf32> to vector<1x2x256xf32>
    tpu.vector_store %arg2[%c1, %c0_7, %c0_8], %10 {strides = array<i32>} : memref<2x2x256xf32, #tpu.memory_space<vmem>>, vector<1x2x256xf32>,
    return
  }
  func.func @transform_0(%arg0: i32) -> (i32, i32, i32) {
    %c0_i32 = arith.constant 0 : i32
    %c0_i32_0 = arith.constant 0 : i32
    %c0_i32_1 = arith.constant 0 : i32
    return %c0_i32, %c0_i32_0, %arg0 : i32, i32, i32
  }
  func.func @transform_1(%arg0: i32) -> (i32, i32, i32) {
    %c0_i32 = arith.constant 0 : i32
    %c0_i32_0 = arith.constant 0 : i32
    %c0_i32_1 = arith.constant 0 : i32
    return %c0_i32, %c0_i32_0, %arg0 : i32, i32, i32
  }
}

</mosaic_0001>

<llo_original>
// kernel: tpu_custom_call.1
$region0: #{tpu_custom_call.1}
  #allocation0 [shape = 'u32[]', space=smem, size = 0x4, offset = 0x4, fixed_abs, tag = 'smem constant byte address 0x4 - core index']
  #allocation1 [shape = 'u32[144,128]{1,0:T(1,128)}', space=vmem, size = 0x12000, scoped, tag = 'internal scratch']
  %s0 = inlined_call_operand.hbm [shape: f32[2,2,256], index: 0, kind: input, shape index: {}]
  %s1 = inlined_call_operand.hbm [shape: f32[2,2,256], index: 1, kind: output, shape index: {}]
  %s2 = sld [smem:[#allocation0]]
  $region18: #{tpu_custom_call.1} parent=0
    _
  %s4 = ssub.s32 1, %s2
  %s5 = scalar_select 0, %s4, %s2
  $region1: #{tpu_custom_call.1} parent=0
    #allocation2 [shape = 'u8[4096]{0}', space=vmem, size = 0x1000, scoped, tag = 'input window, operand 0, single buffered']
    #allocation3 [shape = 's32[1]{0}', space=sflag, size = 0x4, scoped, tag = 'scoped memory for tpu_custom_call.1']
    #allocation4 [shape = 's32[1]{0}', space=sflag, size = 0x4, scoped, tag = 'scoped memory for tpu_custom_call.1']
    #allocation5 [shape = 'u8[4096]{0}', space=vmem, size = 0x1000, scoped, tag = 'output window, operand 0, single buffered']
    %6 = vsyncpa [#allocation3], 0
    %7 = vsyncpa [#allocation4], 0
    // Predicated region
    $region2: #{tpu_custom_call.1} parent=1 // pred_check
      _
    $region3: #{tpu_custom_call.1} parent=1 // pred_check_branch
      %9 = sbr.rel (0) target = $region5
    $region4: #{tpu_custom_call.1} parent=1 // pred_region
      %s11 = ssub.s32 128, 128
      %12 = vsyncadd [#allocation3], %s11
      %s13 = sshll.u32 [#allocation2], 4
      %s14 = int_to_ptr.vmem [resolvable:$true] %s13
      %19 = dma.hbm_to_vmem [thread:$0]  %s0, 128, %s14, [#allocation3], 64, 64, 4
    $region5: #{tpu_custom_call.1} parent=1 // pred_fallthru
      _
    // Predicated region
    $region6: #{tpu_custom_call.1} parent=1 // pred_check
      _
    $region7: #{tpu_custom_call.1} parent=1 // pred_check_branch
      %21 = sbr.rel (0) target = $region9
    $region8: #{tpu_custom_call.1} parent=1 // pred_region
      %22 = dma.done [#allocation3], 128
    $region9: #{tpu_custom_call.1} parent=1 // pred_fallthru
      _
    %v23 = vld [vmem:[#allocation2] sm:$0xf]
    %v24 = vld [vmem:[#allocation2 + $0x4] sm:$0xf]
    %v28 = vunpack.c.l.s4 1983009808
    %v29 = vunpack.c.0.s8 %v28
    %v30 = vlaneseq
    %v31 = vshrl.u32 %v30, 7
    %v32 = vsub.s32 %v29, %v31
    %v33 = vrot.slane %v23, %v32
    %v34 = vcombine.high %v33, %v33
    %v36 = vunpack.c.l.s4 1983009808
    %v37 = vunpack.c.0.s8 %v36
    %v38 = vlaneseq
    %v39 = vshrl.u32 %v38, 7
    %v40 = vsub.s32 %v37, %v39
    %v41 = vrot.slane %v24, %v40
    %v42 = vcombine.high %v41, %v41
    %vm47 = vcmask 1041408
    %v48 = vsel %vm47, %v33, 0.0
    %v49 = vrot.slane %v48, 4
    %v50 = vadd.f32 %v48, %v49
    %v51 = vrot.slane %v50, 2
    %v52 = vadd.f32 %v50, %v51
    %v53 = vrot.slane %v52, 1
    %v54 = vadd.f32 %v52, %v53
    %v55 = vsel %vm47, %v34, 0.0
    %v56 = vrot.slane %v55, 4
    %v57 = vadd.f32 %v55, %v56
    %v58 = vrot.slane %v57, 2
    %v59 = vadd.f32 %v57, %v58
    %v60 = vrot.slane %v59, 1
    %v61 = vadd.f32 %v59, %v60
    %v62 = vsel %vm47, %v41, 0.0
    %v63 = vrot.slane %v62, 4
    %v64 = vadd.f32 %v62, %v63
    %v65 = vrot.slane %v64, 2
    %v66 = vadd.f32 %v64, %v65
    %v67 = vrot.slane %v66, 1
    %v68 = vadd.f32 %v66, %v67
    %v69 = vsel %vm47, %v42, 0.0
    %v70 = vrot.slane %v69, 4
    %v71 = vadd.f32 %v69, %v70
    %v72 = vrot.slane %v71, 2
    %v73 = vadd.f32 %v71, %v72
    %v74 = vrot.slane %v73, 1
    %v75 = vadd.f32 %v73, %v74
    %v76 = vrcp.pop 2.0
    %v77 = vmul.f32 %v54, %v76
    %v78 = vmul.f32 %v61, %v76
    %v79 = vmul.f32 %v68, %v76
    %v80 = vmul.f32 %v75, %v76
    %v85 = vcombine.low %v77, %v78
    %v87 = vunpack.c.l.s4 1983009808
    %v88 = vunpack.c.0.s8 %v87
    %v89 = vlaneseq
    %v90 = vshrl.u32 %v89, 7
    %v91 = vsub.s32 %v88, %v90
    %v92 = vrot.slane %v85, %v91
    %v93 = vcombine.low %v79, %v80
    %v95 = vunpack.c.l.s4 1983009808
    %v96 = vunpack.c.0.s8 %v95
    %v97 = vlaneseq
    %v98 = vshrl.u32 %v97, 7
    %v99 = vsub.s32 %v96, %v98
    %v100 = vrot.slane %v93, %v99
    %vm101 = vcmask 1044484
    %v102 = vsel %vm101, %v92, %v92
    %vm103 = vcmask 1046534
    %v104 = vsel %vm103, %v92, %v102
    %v105 = vrot.slane %v100, 7
    %vm106 = vcmask 1041409
    %v107 = vsel %vm106, %v105, %v104
    %vm108 = vcmask 1043459
    %v109 = vsel %vm108, %v105, %v107
    %vm110 = vcmask 1045509
    %v111 = vsel %vm110, %v105, %v109
    %vm112 = vcmask 1047559
    %v113 = vsel %vm112, %v105, %v111
    %115 = vst [vmem:[#allocation5] sm:$0xf] %v113
    %v116 = vsel %vm47, %v33, -inf
    %v117 = vrot.slane %v116, 4
    %v118 = vmax.f32 %v116, %v117
    %v119 = vrot.slane %v118, 2
    %v120 = vmax.f32 %v118, %v119
    %v121 = vrot.slane %v120, 1
    %v122 = vmax.f32 %v120, %v121
    %v123 = vsel %vm47, %v34, -inf
    %v124 = vrot.slane %v123, 4
    %v125 = vmax.f32 %v123, %v124
    %v126 = vrot.slane %v125, 2
    %v127 = vmax.f32 %v125, %v126
    %v128 = vrot.slane %v127, 1
    %v129 = vmax.f32 %v127, %v128
    %v130 = vsel %vm47, %v41, -inf
    %v131 = vrot.slane %v130, 4
    %v132 = vmax.f32 %v130, %v131
    %v133 = vrot.slane %v132, 2
    %v134 = vmax.f32 %v132, %v133
    %v135 = vrot.slane %v134, 1
    %v136 = vmax.f32 %v134, %v135
    %v137 = vsel %vm47, %v42, -inf
    %v138 = vrot.slane %v137, 4
    %v139 = vmax.f32 %v137, %v138
    %v140 = vrot.slane %v139, 2
    %v141 = vmax.f32 %v139, %v140
    %v142 = vrot.slane %v141, 1
    %v143 = vmax.f32 %v141, %v142
    %v148 = vcombine.low %v122, %v129
    %v150 = vunpack.c.l.s4 1983009808
    %v151 = vunpack.c.0.s8 %v150
    %v152 = vlaneseq
    %v153 = vshrl.u32 %v152, 7
    %v154 = vsub.s32 %v151, %v153
    %v155 = vrot.slane %v148, %v154
    %v156 = vcombine.low %v136, %v143
    %v158 = vunpack.c.l.s4 1983009808
    %v159 = vunpack.c.0.s8 %v158
    %v160 = vlaneseq
    %v161 = vshrl.u32 %v160, 7
    %v162 = vsub.s32 %v159, %v161
    %v163 = vrot.slane %v156, %v162
    %v164 = vsel %vm101, %v155, %v155
    %v165 = vsel %vm103, %v155, %v164
    %v166 = vrot.slane %v163, 7
    %v167 = vsel %vm106, %v166, %v165
    %v168 = vsel %vm108, %v166, %v167
    %v169 = vsel %vm110, %v166, %v168
    %v170 = vsel %vm112, %v166, %v169
    %s172 = scalar_lea.vmem [#allocation5], 4
    %173 = vst [vmem:[%s172] sm:$0xf] %v170
    // Predicated region
    $region10: #{tpu_custom_call.1} parent=1 // pred_check
      _
    $region11: #{tpu_custom_call.1} parent=1 // pred_check_branch
      %175 = sbr.rel (0) target = $region13
    $region12: #{tpu_custom_call.1} parent=1 // pred_region
      %s177 = ssub.s32 128, 128
      %178 = vsyncadd [#allocation4], %s177
      %s179 = sshll.u32 [#allocation5], 4
      %s180 = int_to_ptr.vmem [resolvable:$true] %s179
      %185 = dma.vmem_to_hbm [thread:$0]  %s180, 128, %s1, [#allocation4], 64, 64, 4
    $region13: #{tpu_custom_call.1} parent=1 // pred_fallthru
      _
    // Predicated region
    $region14: #{tpu_custom_call.1} parent=1 // pred_check
      _
    $region15: #{tpu_custom_call.1} parent=1 // pred_check_branch
      %187 = sbr.rel (0) target = $region17
    $region16: #{tpu_custom_call.1} parent=1 // pred_region
      %188 = dma.done [#allocation4], 128
    $region17: #{tpu_custom_call.1} parent=1 // pred_fallthru
      _
    %189 = vsyncpa [#allocation3], 1
    %190 = vsyncpa [#allocation4], 1

</llo_original>
